<compile_context>
chip_gen: v6e
topology: v6e:2x2x1
jax: 0.10.0
libtpu: 0.0.40
codegen_flags: <defaults>
</compile_context>

<pallas_src>
import math

import jax
import jax.numpy as jnp
from jax.experimental import pallas as pl
from jax.experimental.pallas import tpu as pltpu


def _round_up(x, m):
    return (x + m - 1) // m * m


def _cdiv(a, b):
    return -(-a // b)


def _tpu_kind():
    try:
        return jax.devices()[0].device_kind.lower()
    except Exception:
        return ""


def _default_max_block_b():
    kind = _tpu_kind()
    # v7x: 3.2 TB/s HBM + 2 TCs -> wants the biggest batch tile.
    return 4096 if ("v7" in kind or "7x" in kind) else 2048


def _num_tensorcores():
    kind = _tpu_kind()
    # Chips whose single JAX device spans two TensorCores.
    return 2 if ("v7" in kind or "7x" in kind or "v4" in kind) else 1


def _fused_actor_critic_kernel(x_ref, w1t_ref, b1_ref, w2a_ref, b2a_ref,
                               w2c_ref, b2c_ref, policy_ref, value_ref):
    # x_ref:    (block_b, in_size)
    # w1t_ref:  (in_size, H_pad)   stacked [actor_w1; critic_w1]^T, zero-padded
    # b1_ref:   (1, H_pad)
    # w2a_ref:  (H_pad, A)         actor_w2^T; critic-hidden rows zeroed
    # b2a_ref:  (1, A)
    # w2c_ref:  (1, H_pad)         critic_w2 row; actor-hidden lanes zeroed
    # b2c_ref:  (1, 1)
    # policy_ref: (block_b, A),  value_ref: (block_b, 1)

    # Layer 1 for BOTH heads in one MXU pass, bias + ReLU.
    h = jnp.dot(x_ref[...], w1t_ref[...], preferred_element_type=jnp.float32)
    h = jnp.maximum(h + b1_ref[...], 0.0)

    # Actor layer 2: narrow-N matmul; only the useful A lanes are stored.
    pol = jnp.dot(h, w2a_ref[...], preferred_element_type=jnp.float32)
    policy_ref[...] = (pol + b2a_ref[...]).astype(policy_ref.dtype)

    # Critic layer 2 (output width 1): VPU multiply + XLU lane reduction.
    val = jnp.sum(h * w2c_ref[...], axis=-1, keepdims=True)
    value_ref[...] = (val + b2c_ref[...]).astype(value_ref.dtype)


def prepare_params(actor_w1, actor_b1, actor_w2, actor_b2,
                   critic_w1, critic_b1, critic_w2, critic_b2):
    """One-time (init-time) packing of the four nn.Linear layers.
    Weights use PyTorch [out, in] convention."""
    H, in_size = actor_w1.shape
    A = actor_w2.shape[0]                      # action_space_size
    assert critic_w1.shape == (H, in_size)
    assert critic_w2.shape == (1, H)

    H2 = 2 * H
    H_pad = _round_up(H2, 128)                 # lane-dense hidden width

    # Layer 1: stack [actor; critic] along the output dim, zero-pad, transpose.
    w1 = jnp.zeros((H_pad, in_size), jnp.float32)
    w1 = w1.at[:H].set(actor_w1).at[H:H2].set(critic_w1)
    b1 = jnp.zeros((1, H_pad), jnp.float32)
    b1 = b1.at[0, :H].set(actor_b1).at[0, H:H2].set(critic_b1)

    # Actor layer 2: [H_pad, A] pre-transposed; critic-hidden rows stay zero.
    w2a = jnp.zeros((H_pad, A), jnp.float32)
    w2a = w2a.at[:H, :].set(jnp.asarray(actor_w2, jnp.float32).T)
    b2a = jnp.asarray(actor_b2, jnp.float32).reshape(1, A)

    # Critic layer 2: a single row over the hidden vector; actor lanes zero.
    w2c = jnp.zeros((1, H_pad), jnp.float32)
    w2c = w2c.at[0, H:H2].set(jnp.asarray(critic_w2, jnp.float32)[0])
    b2c = jnp.asarray(critic_b2, jnp.float32).reshape(1, 1)

    return {
        "w1t": jnp.asarray(w1.T),   # [in_size, H_pad]
        "b1": b1,                   # [1, H_pad]
        "w2a_t": w2a,               # [H_pad, A]
        "b2a": b2a,                 # [1, A]
        "w2c": w2c,                 # [1, H_pad]
        "b2c": b2c,                 # [1, 1]
        "action_space_size": A,
        "in_size": in_size,
        "hidden_pad": H_pad,
    }


def separate_actor_critic_forward(x, params, *, max_block_b=None,
                                  min_pallas_batch=256):
    """Returns (policy [B, A], value [B, 1]) = fused forward of the module."""
    B, in_size = x.shape
    assert in_size == params["in_size"]
    A = params["action_space_size"]
    H_pad = params["hidden_pad"]
    w1t, b1 = params["w1t"], params["b1"]
    w2a_t, b2a = params["w2a_t"], params["b2a"]
    w2c, b2c = params["w2c"], params["b2c"]

    # Small (RL-inference sized) batches: fixed pallas_call overhead dominates
    # <1 us of math -> plain XLA fused dots are as fast or faster.
    if B < min_pallas_batch:
        h = jnp.maximum(x @ w1t + b1, 0.0)
        policy = h @ w2a_t + b2a
        value = h @ w2c.T + b2c
        return policy, value

    if max_block_b is None:
        max_block_b = _default_max_block_b()

    # Tile choice:
    #  - big tiles so DMA time dominates the ~0.35 us/step fixed cost,
    #  - >= 2 tiles on dual-TC chips so the parallel grid axis uses both cores,
    #  - near-divisor tile so batch padding is at most a few rows.
    B8 = _round_up(B, 8)
    n_tiles = _cdiv(B8, max_block_b)
    n_tc = _num_tensorcores()
    if n_tc > 1 and B8 >= 16:
        n_tiles = max(n_tiles, n_tc)
    block_b = _round_up(_cdiv(B8, n_tiles), 8)
    B_pad = n_tiles * block_b
    if B_pad != B:
        x = jnp.pad(x, ((0, B_pad - B), (0, 0)))

    policy, value = pl.pallas_call(
        _fused_actor_critic_kernel,
        out_shape=(
            jax.ShapeDtypeStruct((B_pad, A), jnp.float32),
            jax.ShapeDtypeStruct((B_pad, 1), jnp.float32),
        ),
        grid_spec=pltpu.PrefetchScalarGridSpec(
            num_scalar_prefetch=0,
            grid=(n_tiles,),
            in_specs=[
                pl.BlockSpec((block_b, in_size), lambda i: (i, 0)),
                pl.BlockSpec((in_size, H_pad), lambda i: (0, 0)),
                pl.BlockSpec((1, H_pad), lambda i: (0, 0)),
                pl.BlockSpec((H_pad, A), lambda i: (0, 0)),
                pl.BlockSpec((1, A), lambda i: (0, 0)),
                pl.BlockSpec((1, H_pad), lambda i: (0, 0)),
                pl.BlockSpec((1, 1), lambda i: (0, 0)),
            ],
            out_specs=[
                pl.BlockSpec((block_b, A), lambda i: (i, 0)),
                pl.BlockSpec((block_b, 1), lambda i: (i, 0)),
            ],
        ),
        compiler_params=pltpu.CompilerParams(
            # Batch tiles are independent -> shard across both TCs on v7x.
            dimension_semantics=("parallel",)),
    )(x, w1t, b1, w2a_t, b2a, w2c, b2c)

    if B_pad != B:
        policy = policy[:B]
        value = value[:B]
    return policy, value


def _reference(x, aw1, ab1, aw2, ab2, cw1, cb1, cw2, cb2):
    value = jnp.maximum(x @ cw1.T + cb1, 0.0) @ cw2.T + cb2
    policy = jnp.maximum(x @ aw1.T + ab1, 0.0) @ aw2.T + ab2
    return policy, value


if __name__ == "__main__":
    input_size = 32
    hidden_layer_size = 64
    action_space_size = 18      # num_layers == 2 per the module's assert

    key = jax.random.PRNGKey(0)
    kx, kx2, k1, k2, k3, k4, k5, k6, k7, k8 = jax.random.split(key, 10)

    x_small = jax.random.normal(kx, (8, input_size), dtype=jnp.float32)
    x_large = jax.random.normal(kx2, (1000, input_size), dtype=jnp.float32)

    def kaiming_uniform(k, out_f, in_f):
        bound = 1.0 / math.sqrt(in_f)
        return jax.random.uniform(k, (out_f, in_f), jnp.float32, -bound, bound)

    # --- Param set 1: faithful to the module's __init__ ----------------------
    #   all biases filled with 0.0; actor_linear_2.weight filled with 0.0
    actor_w1 = kaiming_uniform(k1, hidden_layer_size, input_size)
    actor_b1 = jnp.zeros((hidden_layer_size,), jnp.float32)
    actor_w2 = jnp.zeros((action_space_size, hidden_layer_size), jnp.float32)
    actor_b2 = jnp.zeros((action_space_size,), jnp.float32)
    critic_w1 = kaiming_uniform(k2, hidden_layer_size, input_size)
    critic_b1 = jnp.zeros((hidden_layer_size,), jnp.float32)
    critic_w2 = kaiming_uniform(k3, 1, hidden_layer_size)
    critic_b2 = jnp.zeros((1,), jnp.float32)

    params1 = prepare_params(actor_w1, actor_b1, actor_w2, actor_b2,
                             critic_w1, critic_b1, critic_w2, critic_b2)
    ref_p, ref_v = _reference(x_small, actor_w1, actor_b1, actor_w2, actor_b2,
                              critic_w1, critic_b1, critic_w2, critic_b2)

    # (a) default path: small batch -> XLA fallback
    policy, value = jax.block_until_ready(
        separate_actor_critic_forward(x_small, params1))
    assert policy.shape == (8, action_space_size) and value.shape == (8, 1)
    assert jnp.allclose(policy, ref_p, atol=1e-4, rtol=1e-4), "policy mismatch (set1/fallback)"
    assert jnp.allclose(value, ref_v, atol=1e-4, rtol=1e-4), "value mismatch (set1/fallback)"

    # (b) force the Pallas kernel at the small shape
    policy, value = jax.block_until_ready(
        separate_actor_critic_forward(x_small, params1, min_pallas_batch=0))
    assert jnp.allclose(policy, ref_p, atol=1e-4, rtol=1e-4), "policy mismatch (set1/pallas)"
    assert jnp.allclose(value, ref_v, atol=1e-4, rtol=1e-4), "value mismatch (set1/pallas)"

    # --- Param set 2: fully random (exercises every weight/bias path) --------
    actor_w1 = kaiming_uniform(k4, hidden_layer_size, input_size)
    actor_b1 = 0.1 * jax.random.normal(k5, (hidden_layer_size,), jnp.float32)
    actor_w2 = kaiming_uniform(k6, action_space_size, hidden_layer_size)
    actor_b2 = 0.1 * jax.random.normal(k7, (action_space_size,), jnp.float32)
    critic_w1 = kaiming_uniform(k8, hidden_layer_size, input_size)
    critic_b1 = 0.1 * jax.random.normal(k1, (hidden_layer_size,), jnp.float32)
    critic_w2 = kaiming_uniform(k2, 1, hidden_layer_size)
    critic_b2 = 0.1 * jax.random.normal(k3, (1,), jnp.float32)

    params2 = prepare_params(actor_w1, actor_b1, actor_w2, actor_b2,
                             critic_w1, critic_b1, critic_w2, critic_b2)

    # (c) small batch through the Pallas kernel
    ref_p, ref_v = _reference(x_small, actor_w1, actor_b1, actor_w2, actor_b2,
                              critic_w1, critic_b1, critic_w2, critic_b2)
    policy, value = jax.block_until_ready(
        separate_actor_critic_forward(x_small, params2, min_pallas_batch=0))
    assert jnp.allclose(policy, ref_p, atol=1e-4, rtol=1e-4), "policy mismatch (set2/small)"
    assert jnp.allclose(value, ref_v, atol=1e-4, rtol=1e-4), "value mismatch (set2/small)"

    # (d) awkward batch (B=1000) through the Pallas kernel with a multi-tile
    #     grid (small max_block_b) to exercise padding + parallel batch axis.
    ref_p, ref_v = _reference(x_large, actor_w1, actor_b1, actor_w2, actor_b2,
                              critic_w1, critic_b1, critic_w2, critic_b2)
    policy, value = jax.block_until_ready(
        separate_actor_critic_forward(x_large, params2,
                                      min_pallas_batch=0, max_block_b=256))
    assert policy.shape == (1000, action_space_size) and value.shape == (1000, 1)
    assert jnp.allclose(policy, ref_p, atol=1e-4, rtol=1e-4), "policy mismatch (set2/large)"
    assert jnp.allclose(value, ref_v, atol=1e-4, rtol=1e-4), "value mismatch (set2/large)"

    print("KERNEL_OK")
</pallas_src>

<mosaic_0001>
module attributes {stable_mosaic.version = 11 : i64} {
  func.func @_fused_actor_critic_kernel(%arg0: i32, %arg1: memref<8x32xf32, #tpu.memory_space<vmem>>, %arg2: memref<32x128xf32, #tpu.memory_space<vmem>>, %arg3: memref<1x128xf32, #tpu.memory_space<vmem>>, %arg4: memref<128x18xf32, #tpu.memory_space<vmem>>, %arg5: memref<1x18xf32, #tpu.memory_space<vmem>>, %arg6: memref<1x128xf32, #tpu.memory_space<vmem>>, %arg7: memref<1x1xf32, #tpu.memory_space<vmem>>, %arg8: memref<8x18xf32, #tpu.memory_space<vmem>>, %arg9: memref<8x1xf32, #tpu.memory_space<vmem>>) attributes {dimension_semantics = [#tpu.dimension_semantics<parallel>], iteration_bounds = array<i64: 1>, scalar_prefetch = 0 : i64, scratch_operands = 0 : i64, tpu.core_type = #tpu.core_type<tc>, window_params = [{transform_indices = @transform_0, window_bounds = array<i64: 8, 32>}, {pipeline_mode = #tpu.pipeline_mode<synchronous>, transform_indices = @transform_1, window_bounds = array<i64: 32, 128>}, {pipeline_mode = #tpu.pipeline_mode<synchronous>, transform_indices = @transform_2, window_bounds = array<i64: 1, 128>}, {pipeline_mode = #tpu.pipeline_mode<synchronous>, transform_indices = @transform_3, window_bounds = array<i64: 128, 18>}, {pipeline_mode = #tpu.pipeline_mode<synchronous>, transform_indices = @transform_4, window_bounds = array<i64: 1, 18>}, {pipeline_mode = #tpu.pipeline_mode<synchronous>, transform_indices = @transform_5, window_bounds = array<i64: 1, 128>}, {pipeline_mode = #tpu.pipeline_mode<synchronous>, transform_indices = @transform_6, window_bounds = array<i64: 1, 1>}, {transform_indices = @transform_7, window_bounds = array<i64: 8, 18>}, {transform_indices = @transform_8, window_bounds = array<i64: 8, 1>}]} {
    %c0 = arith.constant 0 : index
    %c0_0 = arith.constant 0 : index
    %0 = vector.load %arg1[%c0, %c0_0] : memref<8x32xf32, #tpu.memory_space<vmem>>, vector<8x32xf32>
    %c0_1 = arith.constant 0 : index
    %c0_2 = arith.constant 0 : index
    %1 = vector.load %arg2[%c0_1, %c0_2] : memref<32x128xf32, #tpu.memory_space<vmem>>, vector<32x128xf32>
    %cst = arith.constant dense<0.000000e+00> : vector<8x128xf32>
    %2 = tpu.matmul %0, %1, %cst {dimension_numbers = #tpu.dot_dimension_numbers<[1], [0], [0], [1], [0, 0, 1, 1], [], []>} : vector<8x32xf32>, vector<32x128xf32>, vector<8x128xf32> -> vector<8x128xf32>
    %c0_3 = arith.constant 0 : index
    %c0_4 = arith.constant 0 : index
    %3 = vector.load %arg3[%c0_3, %c0_4] : memref<1x128xf32, #tpu.memory_space<vmem>>, vector<1x128xf32>
    %4 = vector.broadcast %3 : vector<1x128xf32> to vector<8x128xf32>
    %5 = arith.addf %2, %4 : vector<8x128xf32>
    %cst_5 = arith.constant 0.000000e+00 : f32
    %6 = vector.broadcast %cst_5 : f32 to vector<8x128xf32>
    %7 = arith.maximumf %5, %6 : vector<8x128xf32>
    %c0_6 = arith.constant 0 : index
    %c0_7 = arith.constant 0 : index
    %8 = vector.load %arg4[%c0_6, %c0_7] : memref<128x18xf32, #tpu.memory_space<vmem>>, vector<128x18xf32>
    %cst_8 = arith.constant dense<0.000000e+00> : vector<8x18xf32>
    %9 = tpu.matmul %7, %8, %cst_8 {dimension_numbers = #tpu.dot_dimension_numbers<[1], [0], [0], [1], [0, 0, 1, 1], [], []>} : vector<8x128xf32>, vector<128x18xf32>, vector<8x18xf32> -> vector<8x18xf32>
    %c0_9 = arith.constant 0 : index
    %c0_10 = arith.constant 0 : index
    %10 = vector.load %arg5[%c0_9, %c0_10] : memref<1x18xf32, #tpu.memory_space<vmem>>, vector<1x18xf32>
    %11 = vector.broadcast %10 : vector<1x18xf32> to vector<8x18xf32>
    %12 = arith.addf %9, %11 : vector<8x18xf32>
    %c0_11 = arith.constant 0 : index
    %c0_12 = arith.constant 0 : index
    %13 = vector.load %arg8[%c0_11, %c0_12] : memref<8x18xf32, #tpu.memory_space<vmem>>, vector<8x18xf32>
    tpu.vector_store %arg8[%c0_11, %c0_12], %12 {strides = array<i32>} : memref<8x18xf32, #tpu.memory_space<vmem>>, vector<8x18xf32>,
    %c0_13 = arith.constant 0 : index
    %c0_14 = arith.constant 0 : index
    %14 = vector.load %arg6[%c0_13, %c0_14] : memref<1x128xf32, #tpu.memory_space<vmem>>, vector<1x128xf32>
    %15 = vector.broadcast %14 : vector<1x128xf32> to vector<8x128xf32>
    %16 = arith.mulf %7, %15 : vector<8x128xf32>
    %cst_15 = arith.constant dense<0.000000e+00> : vector<8xf32>
    %17 = vector.multi_reduction <add>, %16, %cst_15 [1] : vector<8x128xf32> to vector<8xf32>
    %18 = vector.shape_cast %17 : vector<8xf32> to vector<8x1xf32>
    %c0_16 = arith.constant 0 : index
    %c0_17 = arith.constant 0 : index
    %19 = vector.load %arg7[%c0_16, %c0_17] : memref<1x1xf32, #tpu.memory_space<vmem>>, vector<1x1xf32>
    %20 = vector.broadcast %19 : vector<1x1xf32> to vector<8x1xf32>
    %21 = arith.addf %18, %20 : vector<8x1xf32>
    %c0_18 = arith.constant 0 : index
    %c0_19 = arith.constant 0 : index
    %22 = vector.load %arg9[%c0_18, %c0_19] : memref<8x1xf32, #tpu.memory_space<vmem>>, vector<8x1xf32>
    tpu.vector_store %arg9[%c0_18, %c0_19], %21 {strides = array<i32>} : memref<8x1xf32, #tpu.memory_space<vmem>>, vector<8x1xf32>,
    return
  }
  func.func @transform_0(%arg0: i32) -> (i32, i32) {
    %c0_i32 = arith.constant 0 : i32
    %c0_i32_0 = arith.constant 0 : i32
    return %arg0, %c0_i32 : i32, i32
  }
  func.func @transform_1(%arg0: i32) -> (i32, i32) {
    %c0_i32 = arith.constant 0 : i32
    %c0_i32_0 = arith.constant 0 : i32
    %c0_i32_1 = arith.constant 0 : i32
    return %c0_i32, %c0_i32_0 : i32, i32
  }
  func.func @transform_2(%arg0: i32) -> (i32, i32) {
    %c0_i32 = arith.constant 0 : i32
    %c0_i32_0 = arith.constant 0 : i32
    %c0_i32_1 = arith.constant 0 : i32
    return %c0_i32, %c0_i32_0 : i32, i32
  }
  func.func @transform_3(%arg0: i32) -> (i32, i32) {
    %c0_i32 = arith.constant 0 : i32
    %c0_i32_0 = arith.constant 0 : i32
    %c0_i32_1 = arith.constant 0 : i32
    return %c0_i32, %c0_i32_0 : i32, i32
  }
  func.func @transform_4(%arg0: i32) -> (i32, i32) {
    %c0_i32 = arith.constant 0 : i32
    %c0_i32_0 = arith.constant 0 : i32
    %c0_i32_1 = arith.constant 0 : i32
    return %c0_i32, %c0_i32_0 : i32, i32
  }
  func.func @transform_5(%arg0: i32) -> (i32, i32) {
    %c0_i32 = arith.constant 0 : i32
    %c0_i32_0 = arith.constant 0 : i32
    %c0_i32_1 = arith.constant 0 : i32
    return %c0_i32, %c0_i32_0 : i32, i32
  }
  func.func @transform_6(%arg0: i32) -> (i32, i32) {
    %c0_i32 = arith.constant 0 : i32
    %c0_i32_0 = arith.constant 0 : i32
    %c0_i32_1 = arith.constant 0 : i32
    return %c0_i32, %c0_i32_0 : i32, i32
  }
  func.func @transform_7(%arg0: i32) -> (i32, i32) {
    %c0_i32 = arith.constant 0 : i32
    %c0_i32_0 = arith.constant 0 : i32
    return %arg0, %c0_i32 : i32, i32
  }
  func.func @transform_8(%arg0: i32) -> (i32, i32) {
    %c0_i32 = arith.constant 0 : i32
    %c0_i32_0 = arith.constant 0 : i32
    return %arg0, %c0_i32 : i32, i32
  }
}

</mosaic_0001>

<llo_original>
// kernel: tpu_custom_call.1
$region0: #{tpu_custom_call.1}
  #allocation0 [shape = 'u32[]', space=smem, size = 0x4, offset = 0x4, fixed_abs, tag = 'smem constant byte address 0x4 - core index']
  #allocation1 [shape = 'u32[144,128]{1,0:T(1,128)}', space=vmem, size = 0x12000, scoped, tag = 'internal scratch']
  #allocation2 [shape = 'f32[1,1]{1,0:T(1,128)S(1)}', space=vmem, size = 0x200, scoped, tag = 'scoped memory for tpu_custom_call.1']
  %s0 = inlined_call_operand.vmem [shape: f32[8,32], index: 0, kind: input, shape index: {}]
  %s1 = inlined_call_operand.vmem [shape: f32[32,128], index: 1, kind: input, shape index: {}]
  %s2 = inlined_call_operand.vmem [shape: f32[1,128], index: 2, kind: input, shape index: {}]
  %s3 = inlined_call_operand.vmem [shape: f32[128,18], index: 3, kind: input, shape index: {}]
  %s4 = inlined_call_operand.vmem [shape: f32[1,18], index: 4, kind: input, shape index: {}]
  %s5 = inlined_call_operand.vmem [shape: f32[1,128], index: 5, kind: input, shape index: {}]
  %s6 = inlined_call_operand.<no memory space> [shape: f32[1,1], index: 6, kind: input, shape index: {}]
  %s7 = inlined_call_operand.hbm [shape: f32[8,18], index: 7, kind: output, shape index: {0}]
  %s8 = inlined_call_operand.vmem [shape: f32[8,1], index: 8, kind: output, shape index: {1}]
  %9 = xla_tuple %s7, %s8
  %s10 = sld [smem:[#allocation0]]
  $region46: #{tpu_custom_call.1} parent=0
    _
  %s12 = ssub.s32 1, %s10
  %s13 = scalar_select 0, %s12, %s10
  %v14 = vstv %s6
  %15 = vst [vmem:[#allocation2] sm:$0x1] %v14
  $region1: #{tpu_custom_call.1} parent=0
    #allocation3 [shape = 'u8[4096]{0}', space=vmem, size = 0x1000, scoped, tag = 'output window, operand 0, single buffered']
    #allocation4 [shape = 's32[1]{0}', space=sflag, size = 0x4, scoped, tag = 'scoped memory for tpu_custom_call.1']
    %16 = vsyncpa [#allocation4], 0
    // Predicated region
    $region2: #{tpu_custom_call.1} parent=1 // pred_check
      _
    $region3: #{tpu_custom_call.1} parent=1 // pred_check_branch
      %18 = sbr.rel (0) target = $region5
    $region4: #{tpu_custom_call.1} parent=1 // pred_region
      _
    $region5: #{tpu_custom_call.1} parent=1 // pred_fallthru
      _
    // Predicated region
    $region6: #{tpu_custom_call.1} parent=1 // pred_check
      _
    $region7: #{tpu_custom_call.1} parent=1 // pred_check_branch
      %20 = sbr.rel (0) target = $region9
    $region8: #{tpu_custom_call.1} parent=1 // pred_region
      _
    $region9: #{tpu_custom_call.1} parent=1 // pred_fallthru
      _
    // Predicated region
    $region10: #{tpu_custom_call.1} parent=1 // pred_check
      _
    $region11: #{tpu_custom_call.1} parent=1 // pred_check_branch
      %22 = sbr.rel (0) target = $region13
    $region12: #{tpu_custom_call.1} parent=1 // pred_region
      _
    $region13: #{tpu_custom_call.1} parent=1 // pred_fallthru
      _
    // Predicated region
    $region14: #{tpu_custom_call.1} parent=1 // pred_check
      _
    $region15: #{tpu_custom_call.1} parent=1 // pred_check_branch
      %24 = sbr.rel (0) target = $region17
    $region16: #{tpu_custom_call.1} parent=1 // pred_region
      _
    $region17: #{tpu_custom_call.1} parent=1 // pred_fallthru
      _
    // Predicated region
    $region18: #{tpu_custom_call.1} parent=1 // pred_check
      _
    $region19: #{tpu_custom_call.1} parent=1 // pred_check_branch
      %26 = sbr.rel (0) target = $region21
    $region20: #{tpu_custom_call.1} parent=1 // pred_region
      _
    $region21: #{tpu_custom_call.1} parent=1 // pred_fallthru
      _
    // Predicated region
    $region22: #{tpu_custom_call.1} parent=1 // pred_check
      _
    $region23: #{tpu_custom_call.1} parent=1 // pred_check_branch
      %28 = sbr.rel (0) target = $region25
    $region24: #{tpu_custom_call.1} parent=1 // pred_region
      _
    $region25: #{tpu_custom_call.1} parent=1 // pred_fallthru
      _
    // Predicated region
    $region26: #{tpu_custom_call.1} parent=1 // pred_check
      _
    $region27: #{tpu_custom_call.1} parent=1 // pred_check_branch
      %30 = sbr.rel (0) target = $region29
    $region28: #{tpu_custom_call.1} parent=1 // pred_region
      _
    $region29: #{tpu_custom_call.1} parent=1 // pred_fallthru
      _
    %v31 = vld [vmem:[%s0] sm:$0xff]
    %v32 = vld [vmem:[%s1] sm:$0xff]
    %v33 = vld [vmem:[%s1 + $0x8] sm:$0xff]
    %v34 = vld [vmem:[%s1 + $0x10] sm:$0xff]
    %v35 = vld [vmem:[%s1 + $0x18] sm:$0xff]
    %v36 = vld [vmem:[%s2] sm:$0x1]
    %v38 = vlaneseq
    %v39 = vshrl.u32 %v38, 7
    %v40 = vsub.s32 0, %v39
    %v41 = vrot.slane %v36, %v40
    %vm43 = vcmask 261120
    %v45 = vsel %vm43, %v31, 0
    %47 = vmatprep.subr.mxu0 0.0
    %48 = vmatpush1.msra.mxu0 0.0
    %49 = vmatprep.subr.mxu0 0.0
    %50 = vmatpush1.msra.mxu0 0.0
    %51 = vmatprep.subr.mxu0 0.0
    %52 = vmatpush1.msra.mxu0 0.0
    %53 = vmatprep.subr.mxu0 0.0
    %54 = vmatpush1.msra.mxu0 0.0
    %55 = vmatprep.subr.mxu0 0.0
    %56 = vmatpush1.msra.mxu0 0.0
    %57 = vmatprep.subr.mxu0 0.0
    %58 = vmatpush1.msra.mxu0 0.0
    %59 = vmatprep.subr.mxu0 0.0
    %60 = vmatpush1.msra.mxu0 0.0
    %61 = vmatprep.subr.mxu0 0.0
    %62 = vmatpush1.msra.mxu0 0.0
    %63 = vmatprep.subr.mxu0 0.0
    %64 = vmatpush1.msra.mxu0 0.0
    %65 = vmatprep.subr.mxu0 0.0
    %66 = vmatpush1.msra.mxu0 0.0
    %67 = vmatprep.subr.mxu0 0.0
    %68 = vmatpush1.msra.mxu0 0.0
    %69 = vmatprep.subr.mxu0 0.0
    %70 = vmatpush1.msra.mxu0 0.0
    %71 = vmatprep.subr.mxu0 0.0
    %72 = vmatpush1.msra.mxu0 %v35
    %73 = vmatprep.subr.mxu0 0.0
    %74 = vmatpush1.msra.mxu0 %v34
    %75 = vmatprep.subr.mxu0 0.0
    %76 = vmatpush1.msra.mxu0 %v33
    %77 = vmatprep.subr.mxu0 0.0
    %78 = vmatpush1.msra.mxu0 %v32
    %79 = vmatprep.subr.mxu0 0.0
    %80 = vmatpush2.msra.mxu0 0.0
    %81 = vmatprep.subr.mxu0 0.0
    %82 = vmatpush2.msra.mxu0 0.0
    %83 = vmatprep.subr.mxu0 0.0
    %84 = vmatpush2.msra.mxu0 0.0
    %85 = vmatprep.subr.mxu0 0.0
    %86 = vmatpush2.msra.mxu0 0.0
    %87 = vmatprep.subr.mxu0 0.0
    %88 = vmatpush2.msra.mxu0 0.0
    %89 = vmatprep.subr.mxu0 0.0
    %90 = vmatpush2.msra.mxu0 0.0
    %91 = vmatprep.subr.mxu0 0.0
    %92 = vmatpush2.msra.mxu0 0.0
    %93 = vmatprep.subr.mxu0 0.0
    %94 = vmatpush2.msra.mxu0 0.0
    %95 = vmatprep.subr.mxu0 0.0
    %96 = vmatpush2.msra.mxu0 0.0
    %97 = vmatprep.subr.mxu0 0.0
    %98 = vmatpush2.msra.mxu0 0.0
    %99 = vmatprep.subr.mxu0 0.0
    %100 = vmatpush2.msra.mxu0 0.0
    %101 = vmatprep.subr.mxu0 0.0
    %102 = vmatpush2.msra.mxu0 0.0
    %103 = vmatprep.subr.mxu0 0.0
    %104 = vmatpush2.msra.mxu0 0.0
    %105 = vmatprep.subr.mxu0 0.0
    %106 = vmatpush2.msra.mxu0 0.0
    %107 = vmatprep.subr.mxu0 0.0
    %108 = vmatpush2.msra.mxu0 0.0
    %109 = vmatprep.subr.mxu0 0.0
    %110 = vmatpush2.msra.mxu0 0.0
    %111 = vmatprep.mubr.f32.mxu0 0.0
    %112 = vmatmul.mubr.f32.gmra.mxu0 %v45
    %v113 = vpop.f32.mrf.mxu0
    %v114 = vadd.f32 %v41, %v113
    %v115 = vpop.f32.mrf.mxu0
    %116 = vdwg.mxu0
    %v117 = vmax.f32 %v114, 0.0
    %v118 = vld [vmem:[%s3] sm:$0xff]
    %v119 = vld [vmem:[%s3 + $0x8] sm:$0xff]
    %v120 = vld [vmem:[%s3 + $0x10] sm:$0xff]
    %v121 = vld [vmem:[%s3 + $0x18] sm:$0xff]
    %v122 = vld [vmem:[%s3 + $0x20] sm:$0xff]
    %v123 = vld [vmem:[%s3 + $0x28] sm:$0xff]
    %v124 = vld [vmem:[%s3 + $0x30] sm:$0xff]
    %v125 = vld [vmem:[%s3 + $0x38] sm:$0xff]
    %v126 = vld [vmem:[%s3 + $0x40] sm:$0xff]
    %v127 = vld [vmem:[%s3 + $0x48] sm:$0xff]
    %v128 = vld [vmem:[%s3 + $0x50] sm:$0xff]
    %v129 = vld [vmem:[%s3 + $0x58] sm:$0xff]
    %v130 = vld [vmem:[%s3 + $0x60] sm:$0xff]
    %v131 = vld [vmem:[%s3 + $0x68] sm:$0xff]
    %v132 = vld [vmem:[%s3 + $0x70] sm:$0xff]
    %v133 = vld [vmem:[%s3 + $0x78] sm:$0xff]
    %v134 = vld [vmem:[%s4] sm:$0x1]
    %v136 = vlaneseq
    %v137 = vshrl.u32 %v136, 7
    %v138 = vsub.s32 0, %v137
    %v139 = vrot.slane %v134, %v138
    %141 = vmatprep.subr.mxu0 0.0
    %142 = vmatpush1.msra.mxu0 %v133
    %143 = vmatprep.subr.mxu0 0.0
    %144 = vmatpush1.msra.mxu0 %v132
    %145 = vmatprep.subr.mxu0 0.0
    %146 = vmatpush1.msra.mxu0 %v131
    %147 = vmatprep.subr.mxu0 0.0
    %148 = vmatpush1.msra.mxu0 %v130
    %149 = vmatprep.subr.mxu0 0.0
    %150 = vmatpush1.msra.mxu0 %v129
    %151 = vmatprep.subr.mxu0 0.0
    %152 = vmatpush1.msra.mxu0 %v128
    %153 = vmatprep.subr.mxu0 0.0
    %154 = vmatpush1.msra.mxu0 %v127
    %155 = vmatprep.subr.mxu0 0.0
    %156 = vmatpush1.msra.mxu0 %v126
    %157 = vmatprep.subr.mxu0 0.0
    %158 = vmatpush1.msra.mxu0 %v125
    %159 = vmatprep.subr.mxu0 0.0
    %160 = vmatpush1.msra.mxu0 %v124
    %161 = vmatprep.subr.mxu0 0.0
    %162 = vmatpush1.msra.mxu0 %v123
    %163 = vmatprep.subr.mxu0 0.0
    %164 = vmatpush1.msra.mxu0 %v122
    %165 = vmatprep.subr.mxu0 0.0
    %166 = vmatpush1.msra.mxu0 %v121
    %167 = vmatprep.subr.mxu0 0.0
    %168 = vmatpush1.msra.mxu0 %v120
    %169 = vmatprep.subr.mxu0 0.0
    %170 = vmatpush1.msra.mxu0 %v119
    %171 = vmatprep.subr.mxu0 0.0
    %172 = vmatpush1.msra.mxu0 %v118
    %173 = vmatprep.subr.mxu0 0.0
    %174 = vmatpush2.msra.mxu0 0.0
    %175 = vmatprep.subr.mxu0 0.0
    %176 = vmatpush2.msra.mxu0 0.0
    %177 = vmatprep.subr.mxu0 0.0
    %178 = vmatpush2.msra.mxu0 0.0
    %179 = vmatprep.subr.mxu0 0.0
    %180 = vmatpush2.msra.mxu0 0.0
    %181 = vmatprep.subr.mxu0 0.0
    %182 = vmatpush2.msra.mxu0 0.0
    %183 = vmatprep.subr.mxu0 0.0
    %184 = vmatpush2.msra.mxu0 0.0
    %185 = vmatprep.subr.mxu0 0.0
    %186 = vmatpush2.msra.mxu0 0.0
    %187 = vmatprep.subr.mxu0 0.0
    %188 = vmatpush2.msra.mxu0 0.0
    %189 = vmatprep.subr.mxu0 0.0
    %190 = vmatpush2.msra.mxu0 0.0
    %191 = vmatprep.subr.mxu0 0.0
    %192 = vmatpush2.msra.mxu0 0.0
    %193 = vmatprep.subr.mxu0 0.0
    %194 = vmatpush2.msra.mxu0 0.0
    %195 = vmatprep.subr.mxu0 0.0
    %196 = vmatpush2.msra.mxu0 0.0
    %197 = vmatprep.subr.mxu0 0.0
    %198 = vmatpush2.msra.mxu0 0.0
    %199 = vmatprep.subr.mxu0 0.0
    %200 = vmatpush2.msra.mxu0 0.0
    %201 = vmatprep.subr.mxu0 0.0
    %202 = vmatpush2.msra.mxu0 0.0
    %203 = vmatprep.subr.mxu0 0.0
    %204 = vmatpush2.msra.mxu0 0.0
    %205 = vmatprep.mubr.f32.mxu0 0.0
    %206 = vmatmul.mubr.f32.gmra.mxu0 %v117
    %v207 = vpop.f32.mrf.mxu0
    %v208 = vadd.f32 %v139, %v207
    %v209 = vpop.f32.mrf.mxu0
    %210 = vdwg.mxu0
    %vm211 = vcmask 146432
    %212 = vst.msk [vmem:[#allocation3] sm:$0xff] %vm211, %v208
    %v213 = vld [vmem:[%s5] sm:$0x1]
    %v215 = vlaneseq
    %v216 = vshrl.u32 %v215, 7
    %v217 = vsub.s32 0, %v216
    %v218 = vrot.slane %v213, %v217
    %v220 = vmul.f32 %v117, %v218
    %221 = vadd.xlane.f32.xlu0 %v220
    %v222 = vpop.xlane.xlu0 %221
    %v223 = vld [vmem:[#allocation2] sm:$0x1]
    %v225 = vlaneseq
    %v226 = vshrl.u32 %v225, 7
    %v227 = vsub.s32 0, %v226
    %v228 = vrot.slane %v223, %v227
    %v230 = vadd.f32 %v222, %v228
    %vm231 = vcmask 7168
    %232 = vst.msk [vmem:[%s8] sm:$0xff] %vm231, %v230
    // Predicated region
    $region30: #{tpu_custom_call.1} parent=1 // pred_check
      _
    $region31: #{tpu_custom_call.1} parent=1 // pred_check_branch
      %234 = sbr.rel (0) target = $region33
    $region32: #{tpu_custom_call.1} parent=1 // pred_region
      %s236 = ssub.s32 128, 128
      %237 = vsyncadd [#allocation4], %s236
      %s239 = sshll.u32 [#allocation3], 4
      %s240 = int_to_ptr.vmem [resolvable:$true] %s239
      %242 = dma.vmem_to_hbm [thread:$0]  %s240, 128, %s7, [#allocation4]
    $region33: #{tpu_custom_call.1} parent=1 // pred_fallthru
      _
    // Predicated region
    $region34: #{tpu_custom_call.1} parent=1 // pred_check
      _
    $region35: #{tpu_custom_call.1} parent=1 // pred_check_branch
      %244 = sbr.rel (0) target = $region37
    $region36: #{tpu_custom_call.1} parent=1 // pred_region
      _
    $region37: #{tpu_custom_call.1} parent=1 // pred_fallthru
      _
    // Predicated region
    $region38: #{tpu_custom_call.1} parent=1 // pred_check
      _
    $region39: #{tpu_custom_call.1} parent=1 // pred_check_branch
      %246 = sbr.rel (0) target = $region41
    $region40: #{tpu_custom_call.1} parent=1 // pred_region
      %247 = dma.done [#allocation4], 128
    $region41: #{tpu_custom_call.1} parent=1 // pred_fallthru
      _
    // Predicated region
    $region42: #{tpu_custom_call.1} parent=1 // pred_check
      _
    $region43: #{tpu_custom_call.1} parent=1 // pred_check_branch
      %249 = sbr.rel (0) target = $region45
    $region44: #{tpu_custom_call.1} parent=1 // pred_region
      _
    $region45: #{tpu_custom_call.1} parent=1 // pred_fallthru
      _
    %250 = vsyncpa [#allocation4], 1

</llo_original>
